<compile_context>
chip_gen: v7x
topology: tpu7x:2x2x1
jax: 0.10.0
libtpu: 0.0.40
codegen_flags: <defaults>
</compile_context>

<pallas_src>
import functools
import math

import jax
import jax.numpy as jnp
from jax.experimental import pallas as pl
from jax.experimental.pallas import tpu as pltpu

LANE = 128


def _round_up(x, m):
    return (x + m - 1) // m * m


def _pad_to(a, shape):
    return jnp.pad(a, [(0, s - d) for d, s in zip(a.shape, shape)])


# ----------------------------------------------------------------------------
# Small-graph path: one fused kernel, everything resident in VMEM.
# ----------------------------------------------------------------------------
def _gae_fused_kernel(adj_ref, x_ref, w1_ref, b1_ref, w2_ref, b2_ref, out_ref):
    """out = adj @ (relu(adj @ (x @ W1 + b1)) @ W2 + b2); all blocks = full arrays."""
    adj = adj_ref[...]  # bf16 (n_pad, n_pad), read once, reused for both layers

    # Layer 1: T1 = x @ W1 + b1 ; z0 = relu(adj @ T1)
    t1 = jnp.dot(x_ref[...], w1_ref[...], preferred_element_type=jnp.float32)
    t1 = (t1 + b1_ref[...]).astype(jnp.bfloat16)
    z0 = jnp.dot(adj, t1, preferred_element_type=jnp.float32)
    z0 = jnp.maximum(z0, 0.0).astype(jnp.bfloat16)

    # TODO(synk): dropout is identity in eval mode; training-mode Bernoulli
    # masking (pltpu.prng_seed + pltpu.prng_random_bits) is not implemented.

    # Layer 2: T2 = z0 @ W2 + b2 ; out = adj @ T2
    t2 = jnp.dot(z0, w2_ref[...], preferred_element_type=jnp.float32)
    t2 = (t2 + b2_ref[...]).astype(jnp.bfloat16)
    out_ref[...] = jnp.dot(adj, t2, preferred_element_type=jnp.float32)


def gae_fused(adj_p, x_p, w1_p, b1_p, w2_p, b2_p):
    n_pad = adj_p.shape[0]
    h2_pad = w2_p.shape[1]
    return pl.pallas_call(
        _gae_fused_kernel,
        out_shape=jax.ShapeDtypeStruct((n_pad, h2_pad), jnp.float32),
        compiler_params=pltpu.CompilerParams(vmem_limit_bytes=48 * 1024 * 1024),
    )(adj_p, x_p, w1_p, b1_p, w2_p, b2_p)


# ----------------------------------------------------------------------------
# Large-graph path, kernel A: T = H @ W + b (hoisted out of the adj grid).
# ----------------------------------------------------------------------------
def _linear_kernel(h_ref, w_ref, b_ref, out_ref):
    t = jnp.dot(h_ref[...], w_ref[...], preferred_element_type=jnp.float32)
    out_ref[...] = (t + b_ref[...]).astype(out_ref.dtype)


def linear_rows(h, w, b, *, tm, out_dtype=jnp.bfloat16):
    """T = h @ w + b, row-tiled; W/b stay resident (they are tiny)."""
    n_pad, h_in = h.shape
    h_out = w.shape[1]
    return pl.pallas_call(
        _linear_kernel,
        out_shape=jax.ShapeDtypeStruct((n_pad, h_out), out_dtype),
        grid=(n_pad // tm,),
        in_specs=[
            pl.BlockSpec((tm, h_in), lambda i: (i, 0)),      # activation rows
            pl.BlockSpec((h_in, h_out), lambda i: (0, 0)),   # W (resident)
            pl.BlockSpec((1, h_out), lambda i: (0, 0)),      # b (resident)
        ],
        out_specs=pl.BlockSpec((tm, h_out), lambda i: (i, 0)),
        compiler_params=pltpu.CompilerParams(
            dimension_semantics=("parallel",),
            vmem_limit_bytes=48 * 1024 * 1024,
        ),
    )(h, w, b)


# ----------------------------------------------------------------------------
# Large-graph path, kernel B: out = act(adj @ T), adj streamed in big tiles.
# ----------------------------------------------------------------------------
def _spmm_kernel(adj_ref, t_ref, out_ref, acc_ref, *, apply_relu, tk, t_resident):
    k = pl.program_id(1)

    @pl.when(k == 0)
    def _():
        acc_ref[...] = jnp.zeros_like(acc_ref)

    if t_resident:
        # T is fully resident in VMEM; slice the rows matching this adj K-tile.
        start = pl.multiple_of(k * tk, tk)
        t_blk = t_ref[pl.ds(start, tk), :]
    else:
        t_blk = t_ref[...]

    acc_ref[...] += jnp.dot(adj_ref[...], t_blk, preferred_element_type=jnp.float32)

    @pl.when(k == pl.num_programs(1) - 1)
    def _():
        r = acc_ref[...]
        if apply_relu:
            r = jnp.maximum(r, 0.0)
        out_ref[...] = r.astype(out_ref.dtype)


def spmm(adj, t, *, apply_relu, out_dtype, tm, tk, t_resident_bytes=16 * 1024 * 1024):
    """out = act(adj @ t). adj streams in (tm, tk) tiles; T stays VMEM-resident
    when it fits the budget (the adj stream is then the only HBM traffic)."""
    n_pad = adj.shape[0]
    h_out = t.shape[1]
    grid_i = n_pad // tm
    grid_k = n_pad // tk
    t_bytes = t.size * t.dtype.itemsize
    t_resident = t_bytes <= t_resident_bytes

    if t_resident:
        t_spec = pl.BlockSpec((n_pad, h_out), lambda i, k: (0, 0))   # DMA'd once
    else:
        t_spec = pl.BlockSpec((tk, h_out), lambda i, k: (k, 0))      # streamed per k

    kernel = functools.partial(
        _spmm_kernel, apply_relu=apply_relu, tk=tk, t_resident=t_resident
    )

    flops = 2 * n_pad * n_pad * h_out
    bytes_accessed = (
        adj.size * adj.dtype.itemsize
        + (t_bytes if t_resident else grid_i * t_bytes)
        + n_pad * h_out * jnp.dtype(out_dtype).itemsize
    )

    return pl.pallas_call(
        kernel,
        out_shape=jax.ShapeDtypeStruct((n_pad, h_out), out_dtype),
        grid=(grid_i, grid_k),
        in_specs=[pl.BlockSpec((tm, tk), lambda i, k: (i, k)), t_spec],
        out_specs=pl.BlockSpec((tm, h_out), lambda i, k: (i, 0)),
        scratch_shapes=[pltpu.VMEM((tm, h_out), jnp.float32)],
        compiler_params=pltpu.CompilerParams(
            dimension_semantics=("parallel", "arbitrary"),
            vmem_limit_bytes=48 * 1024 * 1024,   # fits v7x 64 MiB/TC with headroom
        ),
        cost_estimate=pl.CostEstimate(
            flops=flops, transcendentals=0, bytes_accessed=bytes_accessed
        ),
    )(adj, t)


# ----------------------------------------------------------------------------
# Wrapper
# ----------------------------------------------------------------------------
def preprocess_adj(adj, n_pad):
    """Zero-pad to (n_pad, n_pad) and cast to bf16 (single fused XLA pass).

    adj is static across GAE forward passes; in a real training/inference loop
    this should be computed once and reused so the O(N^2) pad+cast never
    competes with the kernels' adj HBM stream.
    """
    return _pad_to(adj, (n_pad, n_pad)).astype(jnp.bfloat16)


def _fused_vmem_estimate(n_pad, f_pad, h1_pad, h2_pad):
    """Rough resident footprint of the fused kernel (inputs + intermediates)."""
    bf16, f32 = 2, 4
    return (
        n_pad * n_pad * bf16                               # adj
        + n_pad * f_pad * bf16                             # x
        + f_pad * h1_pad * bf16 + h1_pad * h2_pad * bf16   # weights
        + n_pad * h1_pad * (f32 + bf16)                    # T1 / z0
        + n_pad * h2_pad * (f32 + bf16)                    # T2
        + n_pad * h2_pad * f32                             # output
    )


def gae_forward(x_in, adj, w1, b1, w2, b2, *, tm=256, tk=512,
                fused_vmem_budget=40 * 1024 * 1024):
    """x_in: [N, F], adj: [N, N], w1: [F, H1], b1: [1, H1], w2: [H1, H2], b2: [1, H2]."""
    n, f = x_in.shape
    h2 = w2.shape[1]
    h1 = w1.shape[1]
    f_pad = _round_up(f, LANE)
    h1_pad = _round_up(h1, LANE)
    h2_pad = _round_up(h2, LANE)

    # Small graphs -> single fused VMEM-resident kernel; otherwise tiled path.
    n_pad_small = _round_up(n, 256)   # 256: lane-dense cols + bf16 16-row packing
    use_fused = (
        _fused_vmem_estimate(n_pad_small, f_pad, h1_pad, h2_pad) <= fused_vmem_budget
    )
    n_pad = n_pad_small if use_fused else _round_up(n, math.lcm(tm, tk))

    # Zero padding is exact: padded adj columns are zero, so the spurious bias on
    # padded activation rows never reaches real outputs; padded rows/cols of the
    # result are sliced off below.
    adj_p = preprocess_adj(adj, n_pad)
    x_p = _pad_to(x_in, (n_pad, f_pad)).astype(jnp.bfloat16)
    w1_p = _pad_to(w1, (f_pad, h1_pad)).astype(jnp.bfloat16)
    b1_p = _pad_to(b1, (1, h1_pad)).astype(jnp.float32)
    w2_p = _pad_to(w2, (h1_pad, h2_pad)).astype(jnp.bfloat16)
    b2_p = _pad_to(b2, (1, h2_pad)).astype(jnp.float32)

    if use_fused:
        out_p = gae_fused(adj_p, x_p, w1_p, b1_p, w2_p, b2_p)
    else:
        # Layer 1: T1 = x @ W1 + b1 computed once, then z0 = relu(adj @ T1).
        t1 = linear_rows(x_p, w1_p, b1_p, tm=tm)
        z0 = spmm(adj_p, t1, apply_relu=True, out_dtype=jnp.bfloat16, tm=tm, tk=tk)
        # TODO(synk): dropout is identity in eval mode (training mode not implemented).
        # Layer 2: T2 = z0 @ W2 + b2 computed once, then out = adj @ T2.
        t2 = linear_rows(z0, w2_p, b2_p, tm=tm)
        out_p = spmm(adj_p, t2, apply_relu=False, out_dtype=jnp.float32, tm=tm, tk=tk)

    return out_p[:n, :h2]


# ----------------------------------------------------------------------------
# References
# ----------------------------------------------------------------------------
def reference_forward_f32(x, adj, w1, b1, w2, b2):
    h = x @ w1 + b1
    z0 = jnp.maximum(adj @ h, 0.0)
    z1 = z0 @ w2 + b2
    return adj @ z1


def reference_forward_mixed(x, adj, w1, b1, w2, b2):
    """Same mixed-precision strategy as the kernels (bf16 operands, f32 accumulation)."""
    bf16, f32 = jnp.bfloat16, jnp.float32
    adj_b = adj.astype(bf16)

    def layer(h_b, w, b, relu):
        t = jnp.dot(h_b, w.astype(bf16), preferred_element_type=f32) + b
        out = jnp.dot(adj_b, t.astype(bf16), preferred_element_type=f32)
        return jnp.maximum(out, 0.0) if relu else out

    z0 = layer(x.astype(bf16), w1, b1, True).astype(bf16)
    return layer(z0, w2, b2, False)


if __name__ == "__main__":
    key = jax.random.PRNGKey(0)
    k_x, k_adj, k_w1, k_b1, k_w2, k_b2 = jax.random.split(key, 6)

    # Small shapes consistent with the module; N is intentionally not a
    # multiple of 128 so the padding paths are exercised.
    N = 200
    n_feat = 96
    n_hidden_1 = 64
    n_hidden_2 = 32

    x_in = jax.random.normal(k_x, (N, n_feat), dtype=jnp.float32)

    # Symmetric normalized adjacency with self loops (standard GAE preprocessing).
    u = jax.random.uniform(k_adj, (N, N), dtype=jnp.float32)
    a = (u + u.T) * 0.5 + jnp.eye(N, dtype=jnp.float32)
    d_inv_sqrt = 1.0 / jnp.sqrt(jnp.sum(a, axis=1))
    adj = a * d_inv_sqrt[:, None] * d_inv_sqrt[None, :]

    # Parameters stored as [in, out] (i.e. PyTorch W^T), biases as [1, out].
    w1 = jax.random.normal(k_w1, (n_feat, n_hidden_1), dtype=jnp.float32) * 0.1
    b1 = jax.random.normal(k_b1, (1, n_hidden_1), dtype=jnp.float32) * 0.1
    w2 = jax.random.normal(k_w2, (n_hidden_1, n_hidden_2), dtype=jnp.float32) * 0.1
    b2 = jax.random.normal(k_b2, (1, n_hidden_2), dtype=jnp.float32) * 0.1

    ref_mixed = reference_forward_mixed(x_in, adj, w1, b1, w2, b2)
    ref_f32 = reference_forward_f32(x_in, adj, w1, b1, w2, b2)

    # Path 1: small-graph fused kernel (single launch, adj resident in VMEM).
    out_fused = jax.block_until_ready(gae_forward(x_in, adj, w1, b1, w2, b2))
    assert out_fused.shape == (N, n_hidden_2)
    assert jnp.allclose(out_fused, ref_mixed, atol=5e-3, rtol=5e-3), "fused: mismatch vs mixed ref"
    assert jnp.allclose(out_fused, ref_f32, atol=3e-2, rtol=3e-2), "fused: mismatch vs f32 ref"

    # Path 2: large-graph tiled path (hoisted linear + adj-streaming spmm),
    # forced here with small tiles so the K-accumulation grid is exercised.
    out_tiled = jax.block_until_ready(
        gae_forward(x_in, adj, w1, b1, w2, b2, tm=128, tk=128, fused_vmem_budget=0)
    )
    assert out_tiled.shape == (N, n_hidden_2)
    assert jnp.allclose(out_tiled, ref_mixed, atol=5e-3, rtol=5e-3), "tiled: mismatch vs mixed ref"
    assert jnp.allclose(out_tiled, ref_f32, atol=3e-2, rtol=3e-2), "tiled: mismatch vs f32 ref"

    print("KERNEL_OK")
</pallas_src>

<mosaic_0001>
module attributes {stable_mosaic.version = 11 : i64} {
  func.func @_gae_fused_kernel(%arg0: memref<256x256xbf16, #tpu.memory_space<vmem>>, %arg1: memref<256x128xbf16, #tpu.memory_space<vmem>>, %arg2: memref<128x128xbf16, #tpu.memory_space<vmem>>, %arg3: memref<1x128xf32, #tpu.memory_space<vmem>>, %arg4: memref<128x128xbf16, #tpu.memory_space<vmem>>, %arg5: memref<1x128xf32, #tpu.memory_space<vmem>>, %arg6: memref<256x128xf32, #tpu.memory_space<vmem>>) attributes {dimension_semantics = [], scalar_prefetch = 0 : i64, scratch_operands = 0 : i64, tpu.core_type = #tpu.core_type<tc>} {
    %c0 = arith.constant 0 : index
    %c0_0 = arith.constant 0 : index
    %0 = vector.load %arg0[%c0, %c0_0] : memref<256x256xbf16, #tpu.memory_space<vmem>>, vector<256x256xbf16>
    %c0_1 = arith.constant 0 : index
    %c0_2 = arith.constant 0 : index
    %1 = vector.load %arg1[%c0_1, %c0_2] : memref<256x128xbf16, #tpu.memory_space<vmem>>, vector<256x128xbf16>
    %c0_3 = arith.constant 0 : index
    %c0_4 = arith.constant 0 : index
    %2 = vector.load %arg2[%c0_3, %c0_4] : memref<128x128xbf16, #tpu.memory_space<vmem>>, vector<128x128xbf16>
    %cst = arith.constant dense<0.000000e+00> : vector<256x128xf32>
    %3 = tpu.matmul %1, %2, %cst {dimension_numbers = #tpu.dot_dimension_numbers<[1], [0], [0], [1], [0, 0, 1, 1], [], []>} : vector<256x128xbf16>, vector<128x128xbf16>, vector<256x128xf32> -> vector<256x128xf32>
    %c0_5 = arith.constant 0 : index
    %c0_6 = arith.constant 0 : index
    %4 = vector.load %arg3[%c0_5, %c0_6] : memref<1x128xf32, #tpu.memory_space<vmem>>, vector<1x128xf32>
    %5 = vector.broadcast %4 : vector<1x128xf32> to vector<256x128xf32>
    %6 = arith.addf %3, %5 : vector<256x128xf32>
    %7 = arith.truncf %6 : vector<256x128xf32> to vector<256x128xbf16>
    %cst_7 = arith.constant dense<0.000000e+00> : vector<256x128xf32>
    %8 = tpu.matmul %0, %7, %cst_7 {dimension_numbers = #tpu.dot_dimension_numbers<[1], [0], [0], [1], [0, 0, 1, 1], [], []>} : vector<256x256xbf16>, vector<256x128xbf16>, vector<256x128xf32> -> vector<256x128xf32>
    %cst_8 = arith.constant 0.000000e+00 : f32
    %9 = vector.broadcast %cst_8 : f32 to vector<256x128xf32>
    %10 = arith.maximumf %8, %9 : vector<256x128xf32>
    %11 = arith.truncf %10 : vector<256x128xf32> to vector<256x128xbf16>
    %c0_9 = arith.constant 0 : index
    %c0_10 = arith.constant 0 : index
    %12 = vector.load %arg4[%c0_9, %c0_10] : memref<128x128xbf16, #tpu.memory_space<vmem>>, vector<128x128xbf16>
    %cst_11 = arith.constant dense<0.000000e+00> : vector<256x128xf32>
    %13 = tpu.matmul %11, %12, %cst_11 {dimension_numbers = #tpu.dot_dimension_numbers<[1], [0], [0], [1], [0, 0, 1, 1], [], []>} : vector<256x128xbf16>, vector<128x128xbf16>, vector<256x128xf32> -> vector<256x128xf32>
    %c0_12 = arith.constant 0 : index
    %c0_13 = arith.constant 0 : index
    %14 = vector.load %arg5[%c0_12, %c0_13] : memref<1x128xf32, #tpu.memory_space<vmem>>, vector<1x128xf32>
    %15 = vector.broadcast %14 : vector<1x128xf32> to vector<256x128xf32>
    %16 = arith.addf %13, %15 : vector<256x128xf32>
    %17 = arith.truncf %16 : vector<256x128xf32> to vector<256x128xbf16>
    %cst_14 = arith.constant dense<0.000000e+00> : vector<256x128xf32>
    %18 = tpu.matmul %0, %17, %cst_14 {dimension_numbers = #tpu.dot_dimension_numbers<[1], [0], [0], [1], [0, 0, 1, 1], [], []>} : vector<256x256xbf16>, vector<256x128xbf16>, vector<256x128xf32> -> vector<256x128xf32>
    %c0_15 = arith.constant 0 : index
    %c0_16 = arith.constant 0 : index
    %19 = vector.load %arg6[%c0_15, %c0_16] : memref<256x128xf32, #tpu.memory_space<vmem>>, vector<256x128xf32>
    tpu.vector_store %arg6[%c0_15, %c0_16], %18 {strides = array<i32>} : memref<256x128xf32, #tpu.memory_space<vmem>>, vector<256x128xf32>,
    return
  }
}

</mosaic_0001>

<llo_original>
// kernel: tpu_custom_call.1
$region0: #{tpu_custom_call.1}
  #allocation0 [shape = 'u32[]', space=smem, size = 0x4, offset = 0x4, fixed_abs, tag = 'smem constant byte address 0x4 - core index']
  #allocation1 [shape = 'u32[144,128]{1,0:T(1,128)}', space=vmem, size = 0x12000, scoped, tag = 'internal scratch']
  %s0 = inlined_call_operand.hbm [shape: bf16[256,256], index: 0, kind: input, shape index: {}]
  %s1 = inlined_call_operand.hbm [shape: bf16[256,128], index: 1, kind: input, shape index: {}]
  %s2 = inlined_call_operand.hbm [shape: bf16[128,128], index: 2, kind: input, shape index: {}]
  %s3 = inlined_call_operand.vmem [shape: f32[1,128], index: 3, kind: input, shape index: {}]
  %s4 = inlined_call_operand.hbm [shape: bf16[128,128], index: 4, kind: input, shape index: {}]
  %s5 = inlined_call_operand.vmem [shape: f32[1,128], index: 5, kind: input, shape index: {}]
  %s6 = inlined_call_operand.hbm [shape: f32[256,128], index: 6, kind: output, shape index: {}]
  %s7 = sld [smem:[#allocation0]]
  $region50: #{tpu_custom_call.1} parent=0
    _
  %s9 = ssub.s32 1, %s7
  %s10 = scalar_select 0, %s9, %s7
  $region1: #{tpu_custom_call.1} parent=0
    #allocation2 [shape = 'u8[131072]{0}', space=vmem, size = 0x20000, scoped, tag = 'input window, operand 0, single buffered']
    #allocation3 [shape = 's32[1]{0}', space=sflag, size = 0x4, scoped, tag = 'scoped memory for tpu_custom_call.1']
    #allocation4 [shape = 's32[1]{0}', space=sflag, size = 0x4, scoped, tag = 'scoped memory for tpu_custom_call.1']
    #allocation5 [shape = 'u8[65536]{0}', space=vmem, size = 0x10000, scoped, tag = 'input window, operand 1, single buffered']
    #allocation6 [shape = 's32[1]{0}', space=sflag, size = 0x4, scoped, tag = 'scoped memory for tpu_custom_call.1']
    #allocation7 [shape = 'u8[32768]{0}', space=vmem, size = 0x8000, scoped, tag = 'input window, operand 2, single buffered']
    #allocation8 [shape = 'u8[32768]{0}', space=vmem, size = 0x8000, scoped, tag = 'input window, operand 4, single buffered']
    #allocation9 [shape = 's32[1]{0}', space=sflag, size = 0x4, scoped, tag = 'scoped memory for tpu_custom_call.1']
    #allocation10 [shape = 'u8[131072]{0}', space=vmem, size = 0x20000, scoped, tag = 'output window, operand 0, single buffered']
    %11 = vsyncpa [#allocation3], 0
    %12 = vsyncpa [#allocation6], 0
    %13 = vsyncpa [#allocation9], 0
    %14 = vsyncpa [#allocation4], 0
    // Predicated region
    $region2: #{tpu_custom_call.1} parent=1 // pred_check
      _
    $region3: #{tpu_custom_call.1} parent=1 // pred_check_branch
      %16 = sbr.rel (0) target = $region5
    $region4: #{tpu_custom_call.1} parent=1 // pred_region
      %s18 = ssub.s32 4096, 4096
      %19 = vsyncadd [#allocation3], %s18
      %s20 = sshll.u32 [#allocation2], 4
      %s21 = int_to_ptr.vmem [resolvable:$true] %s20
      %26 = dma.hbm_to_vmem [thread:$0]  %s0, 4096, %s21, [#allocation3], 128, 128, 8
    $region5: #{tpu_custom_call.1} parent=1 // pred_fallthru
      _
    // Predicated region
    $region6: #{tpu_custom_call.1} parent=1 // pred_check
      _
    $region7: #{tpu_custom_call.1} parent=1 // pred_check_branch
      %28 = sbr.rel (0) target = $region9
    $region8: #{tpu_custom_call.1} parent=1 // pred_region
      %s30 = ssub.s32 2048, 2048
      %31 = vsyncadd [#allocation6], %s30
      %s32 = sshll.u32 [#allocation5], 4
      %s33 = int_to_ptr.vmem [resolvable:$true] %s32
      %38 = dma.hbm_to_vmem [thread:$0]  %s1, 2048, %s33, [#allocation6], 64, 64, 4
    $region9: #{tpu_custom_call.1} parent=1 // pred_fallthru
      _
    // Predicated region
    $region10: #{tpu_custom_call.1} parent=1 // pred_check
      _
    $region11: #{tpu_custom_call.1} parent=1 // pred_check_branch
      %40 = sbr.rel (0) target = $region13
    $region12: #{tpu_custom_call.1} parent=1 // pred_region
      %s42 = ssub.s32 1024, 1024
      %43 = vsyncadd [#allocation6], %s42
      %s44 = sshll.u32 [#allocation7], 4
      %s45 = int_to_ptr.vmem [resolvable:$true] %s44
      %50 = dma.hbm_to_vmem [thread:$0]  %s2, 1024, %s45, [#allocation6], 64, 64, 4
    $region13: #{tpu_custom_call.1} parent=1 // pred_fallthru
      _
    // Predicated region
    $region14: #{tpu_custom_call.1} parent=1 // pred_check
      _
    $region15: #{tpu_custom_call.1} parent=1 // pred_check_branch
      %52 = sbr.rel (0) target = $region17
    $region16: #{tpu_custom_call.1} parent=1 // pred_region
      _
    $region17: #{tpu_custom_call.1} parent=1 // pred_fallthru
      _
    // Predicated region
    $region18: #{tpu_custom_call.1} parent=1 // pred_check
      _
    $region19: #{tpu_custom_call.1} parent=1 // pred_check_branch
      %54 = sbr.rel (0) target = $region21
    $region20: #{tpu_custom_call.1} parent=1 // pred_region
      %s56 = ssub.s32 1024, 1024
      %57 = vsyncadd [#allocation9], %s56
      %s58 = sshll.u32 [#allocation8], 4
      %s59 = int_to_ptr.vmem [resolvable:$true] %s58
      %64 = dma.hbm_to_vmem [thread:$0]  %s4, 1024, %s59, [#allocation9], 64, 64, 4
    $region21: #{tpu_custom_call.1} parent=1 // pred_fallthru
      _
    // Predicated region
    $region22: #{tpu_custom_call.1} parent=1 // pred_check
      _
    $region23: #{tpu_custom_call.1} parent=1 // pred_check_branch
      %66 = sbr.rel (0) target = $region25
    $region24: #{tpu_custom_call.1} parent=1 // pred_region
      _
    $region25: #{tpu_custom_call.1} parent=1 // pred_fallthru
      _
    // Predicated region
    $region26: #{tpu_custom_call.1} parent=1 // pred_check
      _
    $region27: #{tpu_custom_call.1} parent=1 // pred_check_branch
      %68 = sbr.rel (0) target = $region29
    $region28: #{tpu_custom_call.1} parent=1 // pred_region
      %69 = dma.done [#allocation3], 4096
    $region29: #{tpu_custom_call.1} parent=1 // pred_fallthru
      _
    // Predicated region
    $region30: #{tpu_custom_call.1} parent=1 // pred_check
      _
    $region31: #{tpu_custom_call.1} parent=1 // pred_check_branch
      %71 = sbr.rel (0) target = $region33
    $region32: #{tpu_custom_call.1} parent=1 // pred_region
      %72 = dma.done [#allocation6], 2048
    $region33: #{tpu_custom_call.1} parent=1 // pred_fallthru
      _
    // Predicated region
    $region34: #{tpu_custom_call.1} parent=1 // pred_check
      _
    $region35: #{tpu_custom_call.1} parent=1 // pred_check_branch
      %74 = sbr.rel (0) target = $region37
    $region36: #{tpu_custom_call.1} parent=1 // pred_region
      %75 = dma.done [#allocation6], 1024
    $region37: #{tpu_custom_call.1} parent=1 // pred_fallthru
      _
    // Predicated region
    $region38: #{tpu_custom_call.1} parent=1 // pred_check
      _
    $region39: #{tpu_custom_call.1} parent=1 // pred_check_branch
      %77 = sbr.rel (0) target = $region41
    $region40: #{tpu_custom_call.1} parent=1 // pred_region
      %78 = dma.done [#allocation9], 1024
    $region41: #{tpu_custom_call.1} parent=1 // pred_fallthru
      _
    %v80 = vld [vmem:[#allocation2] sm:$0xff]
    %v81 = vld [vmem:[#allocation2 + $0x8] sm:$0xff]
    %v82 = vld [vmem:[#allocation2 + $0x10] sm:$0xff]
    %v83 = vld [vmem:[#allocation2 + $0x18] sm:$0xff]
    %v84 = vld [vmem:[#allocation2 + $0x20] sm:$0xff]
    %v85 = vld [vmem:[#allocation2 + $0x28] sm:$0xff]
    %v86 = vld [vmem:[#allocation2 + $0x30] sm:$0xff]
    %v87 = vld [vmem:[#allocation2 + $0x38] sm:$0xff]
    %v88 = vld [vmem:[#allocation2 + $0x40] sm:$0xff]
    %v89 = vld [vmem:[#allocation2 + $0x48] sm:$0xff]
    %v90 = vld [vmem:[#allocation2 + $0x50] sm:$0xff]
    %v91 = vld [vmem:[#allocation2 + $0x58] sm:$0xff]
    %v92 = vld [vmem:[#allocation2 + $0x60] sm:$0xff]
    %v93 = vld [vmem:[#allocation2 + $0x68] sm:$0xff]
    %v94 = vld [vmem:[#allocation2 + $0x70] sm:$0xff]
    %v95 = vld [vmem:[#allocation2 + $0x78] sm:$0xff]
    %v96 = vld [vmem:[#allocation2 + $0x80] sm:$0xff]
    %v97 = vld [vmem:[#allocation2 + $0x88] sm:$0xff]
    %v98 = vld [vmem:[#allocation2 + $0x90] sm:$0xff]
    %v99 = vld [vmem:[#allocation2 + $0x98] sm:$0xff]
    %v100 = vld [vmem:[#allocation2 + $0xa0] sm:$0xff]
    %v101 = vld [vmem:[#allocation2 + $0xa8] sm:$0xff]
    %v102 = vld [vmem:[#allocation2 + $0xb0] sm:$0xff]
    %v103 = vld [vmem:[#allocation2 + $0xb8] sm:$0xff]
    %v104 = vld [vmem:[#allocation2 + $0xc0] sm:$0xff]
    %v105 = vld [vmem:[#allocation2 + $0xc8] sm:$0xff]
    %v106 = vld [vmem:[#allocation2 + $0xd0] sm:$0xff]
    %v107 = vld [vmem:[#allocation2 + $0xd8] sm:$0xff]
    %v108 = vld [vmem:[#allocation2 + $0xe0] sm:$0xff]
    %v109 = vld [vmem:[#allocation2 + $0xe8] sm:$0xff]
    %v110 = vld [vmem:[#allocation2 + $0xf0] sm:$0xff]
    %v111 = vld [vmem:[#allocation2 + $0xf8] sm:$0xff]
    %v112 = vld [vmem:[#allocation5] sm:$0xf]
    %v113 = vld [vmem:[#allocation5 + $0x4] sm:$0xf]
    %v114 = vld [vmem:[#allocation5 + $0x8] sm:$0xf]
    %v115 = vld [vmem:[#allocation5 + $0xc] sm:$0xf]
    %v116 = vld [vmem:[#allocation5 + $0x10] sm:$0xf]
    %v117 = vld [vmem:[#allocation5 + $0x14] sm:$0xf]
    %v118 = vld [vmem:[#allocation5 + $0x18] sm:$0xf]
    %v119 = vld [vmem:[#allocation5 + $0x1c] sm:$0xf]
    %v120 = vld [vmem:[#allocation5 + $0x20] sm:$0xf]
    %v121 = vld [vmem:[#allocation5 + $0x24] sm:$0xf]
    %v122 = vld [vmem:[#allocation5 + $0x28] sm:$0xf]
    %v123 = vld [vmem:[#allocation5 + $0x2c] sm:$0xf]
    %v124 = vld [vmem:[#allocation5 + $0x30] sm:$0xf]
    %v125 = vld [vmem:[#allocation5 + $0x34] sm:$0xf]
    %v126 = vld [vmem:[#allocation5 + $0x38] sm:$0xf]
    %v127 = vld [vmem:[#allocation5 + $0x3c] sm:$0xf]
    %v128 = vld [vmem:[#allocation5 + $0x40] sm:$0xf]
    %v129 = vld [vmem:[#allocation5 + $0x44] sm:$0xf]
    %v130 = vld [vmem:[#allocation5 + $0x48] sm:$0xf]
    %v131 = vld [vmem:[#allocation5 + $0x4c] sm:$0xf]
    %v132 = vld [vmem:[#allocation5 + $0x50] sm:$0xf]
    %v133 = vld [vmem:[#allocation5 + $0x54] sm:$0xf]
    %v134 = vld [vmem:[#allocation5 + $0x58] sm:$0xf]
    %v135 = vld [vmem:[#allocation5 + $0x5c] sm:$0xf]
    %v136 = vld [vmem:[#allocation5 + $0x60] sm:$0xf]
    %v137 = vld [vmem:[#allocation5 + $0x64] sm:$0xf]
    %v138 = vld [vmem:[#allocation5 + $0x68] sm:$0xf]
    %v139 = vld [vmem:[#allocation5 + $0x6c] sm:$0xf]
    %v140 = vld [vmem:[#allocation5 + $0x70] sm:$0xf]
    %v141 = vld [vmem:[#allocation5 + $0x74] sm:$0xf]
    %v142 = vld [vmem:[#allocation5 + $0x78] sm:$0xf]
    %v143 = vld [vmem:[#allocation5 + $0x7c] sm:$0xf]
    %v144 = vld [vmem:[#allocation7] sm:$0xf]
    %v145 = vld [vmem:[#allocation7 + $0x4] sm:$0xf]
    %v146 = vld [vmem:[#allocation7 + $0x8] sm:$0xf]
    %v147 = vld [vmem:[#allocation7 + $0xc] sm:$0xf]
    %v148 = vld [vmem:[#allocation7 + $0x10] sm:$0xf]
    %v149 = vld [vmem:[#allocation7 + $0x14] sm:$0xf]
    %v150 = vld [vmem:[#allocation7 + $0x18] sm:$0xf]
    %v151 = vld [vmem:[#allocation7 + $0x1c] sm:$0xf]
    %v152 = vld [vmem:[#allocation7 + $0x20] sm:$0xf]
    %v153 = vld [vmem:[#allocation7 + $0x24] sm:$0xf]
    %v154 = vld [vmem:[#allocation7 + $0x28] sm:$0xf]
    %v155 = vld [vmem:[#allocation7 + $0x2c] sm:$0xf]
    %v156 = vld [vmem:[#allocation7 + $0x30] sm:$0xf]
    %v157 = vld [vmem:[#allocation7 + $0x34] sm:$0xf]
    %v158 = vld [vmem:[#allocation7 + $0x38] sm:$0xf]
    %v159 = vld [vmem:[#allocation7 + $0x3c] sm:$0xf]
    %v160 = vld [vmem:[%s3] sm:$0x1]
    %v162 = vlaneseq
    %v163 = vshrl.u32 %v162, 7
    %v164 = vsub.s32 0, %v163
    %v165 = vrot.slane %v160, %v164
    %v199 = vunpack.c.l.b16 %v112
    %v200 = vunpack.c.l.b16 %v113
    %v201 = vunpack.c.l.b16 %v114
    %v202 = vunpack.c.l.b16 %v115
    %v203 = vunpack.c.l.b16 %v116
    %v204 = vunpack.c.l.b16 %v117
    %v205 = vunpack.c.l.b16 %v118
    %v206 = vunpack.c.l.b16 %v119
    %v207 = vunpack.c.l.b16 %v120
    %v208 = vunpack.c.l.b16 %v121
    %v209 = vunpack.c.l.b16 %v122
    %v210 = vunpack.c.l.b16 %v123
    %v211 = vunpack.c.l.b16 %v124
    %v212 = vunpack.c.l.b16 %v125
    %v213 = vunpack.c.l.b16 %v126
    %v214 = vunpack.c.l.b16 %v127
    %v215 = vunpack.c.l.b16 %v128
    %v216 = vunpack.c.l.b16 %v129
    %v217 = vunpack.c.l.b16 %v130
    %v218 = vunpack.c.l.b16 %v131
    %v219 = vunpack.c.l.b16 %v132
    %v220 = vunpack.c.l.b16 %v133
    %v221 = vunpack.c.l.b16 %v134
    %v222 = vunpack.c.l.b16 %v135
    %v223 = vunpack.c.l.b16 %v136
    %v224 = vunpack.c.l.b16 %v137
    %v225 = vunpack.c.l.b16 %v138
    %v226 = vunpack.c.l.b16 %v139
    %v227 = vunpack.c.l.b16 %v140
    %v228 = vunpack.c.l.b16 %v141
    %v229 = vunpack.c.l.b16 %v142
    %v230 = vunpack.c.l.b16 %v143
    %v231 = vpack.c.b16 %v200, %v199
    %v232 = vpack.c.b16 %v202, %v201
    %v233 = vpack.c.b16 %v204, %v203
    %v234 = vpack.c.b16 %v206, %v205
    %v235 = vpack.c.b16 %v208, %v207
    %v236 = vpack.c.b16 %v210, %v209
    %v237 = vpack.c.b16 %v212, %v211
    %v238 = vpack.c.b16 %v214, %v213
    %v239 = vpack.c.b16 %v216, %v215
    %v240 = vpack.c.b16 %v218, %v217
    %v241 = vpack.c.b16 %v220, %v219
    %v242 = vpack.c.b16 %v222, %v221
    %v243 = vpack.c.b16 %v224, %v223
    %v244 = vpack.c.b16 %v226, %v225
    %v245 = vpack.c.b16 %v228, %v227
    %v246 = vpack.c.b16 %v230, %v229
    %v279 = vunpack.c.l.b16 %v144
    %v280 = vunpack.c.l.b16 %v145
    %v281 = vunpack.c.l.b16 %v146
    %v282 = vunpack.c.l.b16 %v147
    %v283 = vunpack.c.l.b16 %v148
    %v284 = vunpack.c.l.b16 %v149
    %v285 = vunpack.c.l.b16 %v150
    %v286 = vunpack.c.l.b16 %v151
    %v287 = vunpack.c.l.b16 %v152
    %v288 = vunpack.c.l.b16 %v153
    %v289 = vunpack.c.l.b16 %v154
    %v290 = vunpack.c.l.b16 %v155
    %v291 = vunpack.c.l.b16 %v156
    %v292 = vunpack.c.l.b16 %v157
    %v293 = vunpack.c.l.b16 %v158
    %v294 = vunpack.c.l.b16 %v159
    %v295 = vpack.c.b16 %v280, %v279
    %v296 = vpack.c.b16 %v282, %v281
    %v297 = vpack.c.b16 %v284, %v283
    %v298 = vpack.c.b16 %v286, %v285
    %v299 = vpack.c.b16 %v288, %v287
    %v300 = vpack.c.b16 %v290, %v289
    %v301 = vpack.c.b16 %v292, %v291
    %v302 = vpack.c.b16 %v294, %v293
    %311 = vmatprep.subr.bf16.mxu0 0
    %312 = vmatpush1.bf16.msra.mxu0 %v295
    %313 = vmatprep.subr.bf16.mxu0 0
    %314 = vmatpush1.bf16.msra.mxu0 %v296
    %315 = vmatprep.subr.bf16.mxu0 0
    %316 = vmatpush1.bf16.msra.mxu0 %v297
    %317 = vmatprep.subr.bf16.mxu0 0
    %318 = vmatpush1.bf16.msra.mxu0 %v298
    %319 = vmatprep.subr.bf16.mxu0 0
    %320 = vmatpush1.bf16.msra.mxu0 %v299
    %321 = vmatprep.subr.bf16.mxu0 0
    %322 = vmatpush1.bf16.msra.mxu0 %v300
    %323 = vmatprep.subr.bf16.mxu0 0
    %324 = vmatpush1.bf16.msra.mxu0 %v301
    %325 = vmatprep.subr.bf16.mxu0 0
    %326 = vmatpush1.bf16.msra.mxu0 %v302
    %327 = vmatprep.subr.bf16.mxu0 0
    %328 = vmatpush1.bf16.msra.mxu0 0
    %329 = vmatprep.subr.bf16.mxu0 0
    %330 = vmatpush1.bf16.msra.mxu0 0
    %331 = vmatprep.subr.bf16.mxu0 0
    %332 = vmatpush1.bf16.msra.mxu0 0
    %333 = vmatprep.subr.bf16.mxu0 0
    %334 = vmatpush1.bf16.msra.mxu0 0
    %335 = vmatprep.subr.bf16.mxu0 0
    %336 = vmatpush1.bf16.msra.mxu0 0
    %337 = vmatprep.subr.bf16.mxu0 0
    %338 = vmatpush1.bf16.msra.mxu0 0
    %339 = vmatprep.subr.bf16.mxu0 0
    %340 = vmatpush1.bf16.msra.mxu0 0
    %341 = vmatprep.subr.bf16.mxu0 0
    %342 = vmatpush1.bf16.msra.mxu0 0
    %343 = vmatprep.mubr.bf16.mxu0 0
    %344 = vmatmul.mubr.bf16.gmra.mrb[0].mxu0 %v231
    %v345 = vpop.f32.mrb[0].mxu0
    %v346 = vadd.f32 %v165, %v345
    %v347 = vpop.f32.mrb[0].mxu0
    %v348 = vpop.f32.mrb[0].mxu0
    %v349 = vadd.f32 %v165, %v348
    %v350 = vpop.f32.mrb[0].mxu0
    %351 = vmatprep.mubr.bf16.mxu0 0
    %352 = vmatmul.mubr.bf16.gmra.mrb[0].mxu0 %v232
    %v353 = vpop.f32.mrb[0].mxu0
    %v354 = vadd.f32 %v165, %v353
    %v355 = vpop.f32.mrb[0].mxu0
    %v356 = vpop.f32.mrb[0].mxu0
    %v357 = vadd.f32 %v165, %v356
    %v358 = vpop.f32.mrb[0].mxu0
    %359 = vmatprep.mubr.bf16.mxu0 0
    %360 = vmatmul.mubr.bf16.gmra.mrb[0].mxu0 %v233
    %v361 = vpop.f32.mrb[0].mxu0
    %v362 = vadd.f32 %v165, %v361
    %v363 = vpop.f32.mrb[0].mxu0
    %v364 = vpop.f32.mrb[0].mxu0
    %v365 = vadd.f32 %v165, %v364
    %v366 = vpop.f32.mrb[0].mxu0
    %367 = vmatprep.mubr.bf16.mxu0 0
    %368 = vmatmul.mubr.bf16.gmra.mrb[0].mxu0 %v234
    %v369 = vpop.f32.mrb[0].mxu0
    %v370 = vadd.f32 %v165, %v369
    %v371 = vpop.f32.mrb[0].mxu0
    %v372 = vpop.f32.mrb[0].mxu0
    %v373 = vadd.f32 %v165, %v372
    %v374 = vpop.f32.mrb[0].mxu0
    %375 = vmatprep.mubr.bf16.mxu0 0
    %376 = vmatmul.mubr.bf16.gmra.mrb[0].mxu0 %v235
    %v377 = vpop.f32.mrb[0].mxu0
    %v378 = vadd.f32 %v165, %v377
    %v379 = vpop.f32.mrb[0].mxu0
    %v380 = vpop.f32.mrb[0].mxu0
    %v381 = vadd.f32 %v165, %v380
    %v382 = vpop.f32.mrb[0].mxu0
    %383 = vmatprep.mubr.bf16.mxu0 0
    %384 = vmatmul.mubr.bf16.gmra.mrb[0].mxu0 %v236
    %v385 = vpop.f32.mrb[0].mxu0
    %v386 = vadd.f32 %v165, %v385
    %v387 = vpop.f32.mrb[0].mxu0
    %v388 = vpop.f32.mrb[0].mxu0
    %v389 = vadd.f32 %v165, %v388
    %v390 = vpop.f32.mrb[0].mxu0
    %391 = vmatprep.mubr.bf16.mxu0 0
    %392 = vmatmul.mubr.bf16.gmra.mrb[0].mxu0 %v237
    %v393 = vpop.f32.mrb[0].mxu0
    %v394 = vadd.f32 %v165, %v393
    %v395 = vpop.f32.mrb[0].mxu0
    %v396 = vpop.f32.mrb[0].mxu0
    %v397 = vadd.f32 %v165, %v396
    %v398 = vpop.f32.mrb[0].mxu0
    %399 = vmatprep.mubr.bf16.mxu0 0
    %400 = vmatmul.mubr.bf16.gmra.mrb[0].mxu0 %v238
    %v401 = vpop.f32.mrb[0].mxu0
    %v402 = vadd.f32 %v165, %v401
    %v403 = vpop.f32.mrb[0].mxu0
    %v404 = vpop.f32.mrb[0].mxu0
    %v405 = vadd.f32 %v165, %v404
    %v406 = vpop.f32.mrb[0].mxu0
    %407 = vmatprep.mubr.bf16.mxu0 0
    %408 = vmatmul.mubr.bf16.gmra.mrb[0].mxu0 %v239
    %v409 = vpop.f32.mrb[0].mxu0
    %v410 = vadd.f32 %v165, %v409
    %v411 = vpop.f32.mrb[0].mxu0
    %v412 = vpop.f32.mrb[0].mxu0
    %v413 = vadd.f32 %v165, %v412
    %v414 = vpop.f32.mrb[0].mxu0
    %415 = vmatprep.mubr.bf16.mxu0 0
    %416 = vmatmul.mubr.bf16.gmra.mrb[0].mxu0 %v240
    %v417 = vpop.f32.mrb[0].mxu0
    %v418 = vadd.f32 %v165, %v417
    %v419 = vpop.f32.mrb[0].mxu0
    %v420 = vpop.f32.mrb[0].mxu0
    %v421 = vadd.f32 %v165, %v420
    %v422 = vpop.f32.mrb[0].mxu0
    %423 = vmatprep.mubr.bf16.mxu0 0
    %424 = vmatmul.mubr.bf16.gmra.mrb[0].mxu0 %v241
    %v425 = vpop.f32.mrb[0].mxu0
    %v426 = vadd.f32 %v165, %v425
    %v427 = vpop.f32.mrb[0].mxu0
    %v428 = vpop.f32.mrb[0].mxu0
    %v429 = vadd.f32 %v165, %v428
    %v430 = vpop.f32.mrb[0].mxu0
    %431 = vmatprep.mubr.bf16.mxu0 0
    %432 = vmatmul.mubr.bf16.gmra.mrb[0].mxu0 %v242
    %v433 = vpop.f32.mrb[0].mxu0
    %v434 = vadd.f32 %v165, %v433
    %v435 = vpop.f32.mrb[0].mxu0
    %v436 = vpop.f32.mrb[0].mxu0
    %v437 = vadd.f32 %v165, %v436
    %v438 = vpop.f32.mrb[0].mxu0
    %439 = vmatprep.mubr.bf16.mxu0 0
    %440 = vmatmul.mubr.bf16.gmra.mrb[0].mxu0 %v243
    %v441 = vpop.f32.mrb[0].mxu0
    %v442 = vadd.f32 %v165, %v441
    %v443 = vpop.f32.mrb[0].mxu0
    %v444 = vpop.f32.mrb[0].mxu0
    %v445 = vadd.f32 %v165, %v444
    %v446 = vpop.f32.mrb[0].mxu0
    %447 = vmatprep.mubr.bf16.mxu0 0
    %448 = vmatmul.mubr.bf16.gmra.mrb[0].mxu0 %v244
    %v449 = vpop.f32.mrb[0].mxu0
    %v450 = vadd.f32 %v165, %v449
    %v451 = vpop.f32.mrb[0].mxu0
    %v452 = vpop.f32.mrb[0].mxu0
    %v453 = vadd.f32 %v165, %v452
    %v454 = vpop.f32.mrb[0].mxu0
    %455 = vmatprep.mubr.bf16.mxu0 0
    %456 = vmatmul.mubr.bf16.gmra.mrb[0].mxu0 %v245
    %v457 = vpop.f32.mrb[0].mxu0
    %v458 = vadd.f32 %v165, %v457
    %v459 = vpop.f32.mrb[0].mxu0
    %v460 = vpop.f32.mrb[0].mxu0
    %v461 = vadd.f32 %v165, %v460
    %v462 = vpop.f32.mrb[0].mxu0
    %463 = vmatprep.mubr.bf16.mxu0 0
    %464 = vmatmul.mubr.bf16.gmra.mrb[0].mxu0 %v246
    %v465 = vpop.f32.mrb[0].mxu0
    %v466 = vadd.f32 %v165, %v465
    %v467 = vpop.f32.mrb[0].mxu0
    %v468 = vpop.f32.mrb[0].mxu0
    %v469 = vadd.f32 %v165, %v468
    %v470 = vpop.f32.mrb[0].mxu0
    %471 = vdwg.mxu0
    %v472 = vpack.c.bf16 %v349, %v346
    %v473 = vpack.c.bf16 %v357, %v354
    %v474 = vpack.c.bf16 %v365, %v362
    %v475 = vpack.c.bf16 %v373, %v370
    %v476 = vpack.c.bf16 %v381, %v378
    %v477 = vpack.c.bf16 %v389, %v386
    %v478 = vpack.c.bf16 %v397, %v394
    %v479 = vpack.c.bf16 %v405, %v402
    %v480 = vpack.c.bf16 %v413, %v410
    %v481 = vpack.c.bf16 %v421, %v418
    %v482 = vpack.c.bf16 %v429, %v426
    %v483 = vpack.c.bf16 %v437, %v434
    %v484 = vpack.c.bf16 %v445, %v442
    %v485 = vpack.c.bf16 %v453, %v450
    %v486 = vpack.c.bf16 %v461, %v458
    %v487 = vpack.c.bf16 %v469, %v466
    %v520 = vunpack.c.l.b16 %v80
    %v521 = vunpack.c.h.b16 %v80
    %v522 = vunpack.c.l.b16 %v81
    %v523 = vunpack.c.h.b16 %v81
    %v524 = vunpack.c.l.b16 %v82
    %v525 = vunpack.c.h.b16 %v82
    %v526 = vunpack.c.l.b16 %v83
    %v527 = vunpack.c.h.b16 %v83
    %v528 = vunpack.c.l.b16 %v84
    %v529 = vunpack.c.h.b16 %v84
    %v530 = vunpack.c.l.b16 %v85
    %v531 = vunpack.c.h.b16 %v85
    %v532 = vunpack.c.l.b16 %v86
    %v533 = vunpack.c.h.b16 %v86
    %v534 = vunpack.c.l.b16 %v87
    %v535 = vunpack.c.h.b16 %v87
    %v536 = vunpack.c.l.b16 %v88
    %v537 = vunpack.c.h.b16 %v88
    %v538 = vunpack.c.l.b16 %v89
    %v539 = vunpack.c.h.b16 %v89
    %v540 = vunpack.c.l.b16 %v90
    %v541 = vunpack.c.h.b16 %v90
    %v542 = vunpack.c.l.b16 %v91
    %v543 = vunpack.c.h.b16 %v91
    %v544 = vunpack.c.l.b16 %v92
    %v545 = vunpack.c.h.b16 %v92
    %v546 = vunpack.c.l.b16 %v93
    %v547 = vunpack.c.h.b16 %v93
    %v548 = vunpack.c.l.b16 %v94
    %v549 = vunpack.c.h.b16 %v94
    %v550 = vunpack.c.l.b16 %v95
    %v551 = vunpack.c.h.b16 %v95
    %v552 = vunpack.c.l.b16 %v96
    %v553 = vunpack.c.h.b16 %v96
    %v554 = vunpack.c.l.b16 %v97
    %v555 = vunpack.c.h.b16 %v97
    %v556 = vunpack.c.l.b16 %v98
    %v557 = vunpack.c.h.b16 %v98
    %v558 = vunpack.c.l.b16 %v99
    %v559 = vunpack.c.h.b16 %v99
    %v560 = vunpack.c.l.b16 %v100
    %v561 = vunpack.c.h.b16 %v100
    %v562 = vunpack.c.l.b16 %v101
    %v563 = vunpack.c.h.b16 %v101
    %v564 = vunpack.c.l.b16 %v102
    %v565 = vunpack.c.h.b16 %v102
    %v566 = vunpack.c.l.b16 %v103
    %v567 = vunpack.c.h.b16 %v103
    %v568 = vunpack.c.l.b16 %v104
    %v569 = vunpack.c.h.b16 %v104
    %v570 = vunpack.c.l.b16 %v105
    %v571 = vunpack.c.h.b16 %v105
    %v572 = vunpack.c.l.b16 %v106
    %v573 = vunpack.c.h.b16 %v106
    %v574 = vunpack.c.l.b16 %v107
    %v575 = vunpack.c.h.b16 %v107
    %v576 = vunpack.c.l.b16 %v108
    %v577 = vunpack.c.h.b16 %v108
    %v578 = vunpack.c.l.b16 %v109
    %v579 = vunpack.c.h.b16 %v109
    %v580 = vunpack.c.l.b16 %v110
    %v581 = vunpack.c.h.b16 %v110
    %v582 = vunpack.c.l.b16 %v111
    %v583 = vunpack.c.h.b16 %v111
    %v584 = vpack.c.b16 %v522, %v520
    %v585 = vpack.c.b16 %v523, %v521
    %v586 = vpack.c.b16 %v526, %v524
    %v587 = vpack.c.b16 %v527, %v525
    %v588 = vpack.c.b16 %v530, %v528
    %v589 = vpack.c.b16 %v531, %v529
    %v590 = vpack.c.b16 %v534, %v532
    %v591 = vpack.c.b16 %v535, %v533
    %v592 = vpack.c.b16 %v538, %v536
    %v593 = vpack.c.b16 %v539, %v537
    %v594 = vpack.c.b16 %v542, %v540
    %v595 = vpack.c.b16 %v543, %v541
    %v596 = vpack.c.b16 %v546, %v544
    %v597 = vpack.c.b16 %v547, %v545
    %v598 = vpack.c.b16 %v550, %v548
    %v599 = vpack.c.b16 %v551, %v549
    %v600 = vpack.c.b16 %v554, %v552
    %v601 = vpack.c.b16 %v555, %v553
    %v602 = vpack.c.b16 %v558, %v556
    %v603 = vpack.c.b16 %v559, %v557
    %v604 = vpack.c.b16 %v562, %v560
    %v605 = vpack.c.b16 %v563, %v561
    %v606 = vpack.c.b16 %v566, %v564
    %v607 = vpack.c.b16 %v567, %v565
    %v608 = vpack.c.b16 %v570, %v568
    %v609 = vpack.c.b16 %v571, %v569
    %v610 = vpack.c.b16 %v574, %v572
    %v611 = vpack.c.b16 %v575, %v573
    %v612 = vpack.c.b16 %v578, %v576
    %v613 = vpack.c.b16 %v579, %v577
    %v614 = vpack.c.b16 %v582, %v580
    %v615 = vpack.c.b16 %v583, %v581
    %648 = vmatprep.subr.bf16.mxu0 0
    %649 = vmatpush1.bf16.msra.mxu0 %v472
    %650 = vmatprep.subr.bf16.mxu0 0
    %651 = vmatpush1.bf16.msra.mxu0 %v473
    %652 = vmatprep.subr.bf16.mxu0 0
    %653 = vmatpush1.bf16.msra.mxu0 %v474
    %654 = vmatprep.subr.bf16.mxu0 0
    %655 = vmatpush1.bf16.msra.mxu0 %v475
    %656 = vmatprep.subr.bf16.mxu0 0
    %657 = vmatpush1.bf16.msra.mxu0 %v476
    %658 = vmatprep.subr.bf16.mxu0 0
    %659 = vmatpush1.bf16.msra.mxu0 %v477
    %660 = vmatprep.subr.bf16.mxu0 0
    %661 = vmatpush1.bf16.msra.mxu0 %v478
    %662 = vmatprep.subr.bf16.mxu0 0
    %663 = vmatpush1.bf16.msra.mxu0 %v479
    %664 = vmatprep.subr.bf16.mxu0 0
    %665 = vmatpush1.bf16.msra.mxu0 %v480
    %666 = vmatprep.subr.bf16.mxu0 0
    %667 = vmatpush1.bf16.msra.mxu0 %v481
    %668 = vmatprep.subr.bf16.mxu0 0
    %669 = vmatpush1.bf16.msra.mxu0 %v482
    %670 = vmatprep.subr.bf16.mxu0 0
    %671 = vmatpush1.bf16.msra.mxu0 %v483
    %672 = vmatprep.subr.bf16.mxu0 0
    %673 = vmatpush1.bf16.msra.mxu0 %v484
    %674 = vmatprep.subr.bf16.mxu0 0
    %675 = vmatpush1.bf16.msra.mxu0 %v485
    %676 = vmatprep.subr.bf16.mxu0 0
    %677 = vmatpush1.bf16.msra.mxu0 %v486
    %678 = vmatprep.subr.bf16.mxu0 0
    %679 = vmatpush1.bf16.msra.mxu0 %v487
    %680 = vmatprep.mubr.bf16.mxu0 %v585
    %681 = vmatmul.mubr.bf16.gmra.mrb[0].mxu0 %v584
    %v682 = vpop.f32.mrb[0].mxu0
    %v683 = vadd.f32 0.0, %v682
    %v684 = vpop.f32.mrb[0].mxu0
    %v685 = vpop.f32.mrb[0].mxu0
    %v686 = vadd.f32 0.0, %v685
    %v687 = vpop.f32.mrb[0].mxu0
    %688 = vmatprep.mubr.bf16.mxu0 %v587
    %689 = vmatmul.mubr.bf16.gmra.mrb[0].mxu0 %v586
    %v690 = vpop.f32.mrb[0].mxu0
    %v691 = vadd.f32 0.0, %v690
    %v692 = vpop.f32.mrb[0].mxu0
    %v693 = vpop.f32.mrb[0].mxu0
    %v694 = vadd.f32 0.0, %v693
    %v695 = vpop.f32.mrb[0].mxu0
    %696 = vmatprep.mubr.bf16.mxu0 %v589
    %697 = vmatmul.mubr.bf16.gmra.mrb[0].mxu0 %v588
    %v698 = vpop.f32.mrb[0].mxu0
    %v699 = vadd.f32 0.0, %v698
    %v700 = vpop.f32.mrb[0].mxu0
    %v701 = vpop.f32.mrb[0].mxu0
    %v702 = vadd.f32 0.0, %v701
    %v703 = vpop.f32.mrb[0].mxu0
    %704 = vmatprep.mubr.bf16.mxu0 %v591
    %705 = vmatmul.mubr.bf16.gmra.mrb[0].mxu0 %v590
    %v706 = vpop.f32.mrb[0].mxu0
    %v707 = vadd.f32 0.0, %v706
    %v708 = vpop.f32.mrb[0].mxu0
    %v709 = vpop.f32.mrb[0].mxu0
    %v710 = vadd.f32 0.0, %v709
    %v711 = vpop.f32.mrb[0].mxu0
    %712 = vmatprep.mubr.bf16.mxu0 %v593
    %713 = vmatmul.mubr.bf16.gmra.mrb[0].mxu0 %v592
    %v714 = vpop.f32.mrb[0].mxu0
    %v715 = vadd.f32 0.0, %v714
    %v716 = vpop.f32.mrb[0].mxu0
    %v717 = vpop.f32.mrb[0].mxu0
    %v718 = vadd.f32 0.0, %v717
    %v719 = vpop.f32.mrb[0].mxu0
    %720 = vmatprep.mubr.bf16.mxu0 %v595
    %721 = vmatmul.mubr.bf16.gmra.mrb[0].mxu0 %v594
    %v722 = vpop.f32.mrb[0].mxu0
    %v723 = vadd.f32 0.0, %v722
    %v724 = vpop.f32.mrb[0].mxu0
    %v725 = vpop.f32.mrb[0].mxu0
    %v726 = vadd.f32 0.0, %v725
    %v727 = vpop.f32.mrb[0].mxu0
    %728 = vmatprep.mubr.bf16.mxu0 %v597
    %729 = vmatmul.mubr.bf16.gmra.mrb[0].mxu0 %v596
    %v730 = vpop.f32.mrb[0].mxu0
    %v731 = vadd.f32 0.0, %v730
    %v732 = vpop.f32.mrb[0].mxu0
    %v733 = vpop.f32.mrb[0].mxu0
    %v734 = vadd.f32 0.0, %v733
    %v735 = vpop.f32.mrb[0].mxu0
    %736 = vmatprep.mubr.bf16.mxu0 %v599
    %737 = vmatmul.mubr.bf16.gmra.mrb[0].mxu0 %v598
    %v738 = vpop.f32.mrb[0].mxu0
    %v739 = vadd.f32 0.0, %v738
    %v740 = vpop.f32.mrb[0].mxu0
    %v741 = vpop.f32.mrb[0].mxu0
    %v742 = vadd.f32 0.0, %v741
    %v743 = vpop.f32.mrb[0].mxu0
    %744 = vmatprep.mubr.bf16.mxu0 %v601
    %745 = vmatmul.mubr.bf16.gmra.mrb[0].mxu0 %v600
    %v746 = vpop.f32.mrb[0].mxu0
    %v747 = vadd.f32 0.0, %v746
    %v748 = vpop.f32.mrb[0].mxu0
    %v749 = vpop.f32.mrb[0].mxu0
    %v750 = vadd.f32 0.0, %v749
    %v751 = vpop.f32.mrb[0].mxu0
    %752 = vmatprep.mubr.bf16.mxu0 %v603
    %753 = vmatmul.mubr.bf16.gmra.mrb[0].mxu0 %v602
    %v754 = vpop.f32.mrb[0].mxu0
    %v755 = vadd.f32 0.0, %v754
    %v756 = vpop.f32.mrb[0].mxu0
    %v757 = vpop.f32.mrb[0].mxu0
    %v758 = vadd.f32 0.0, %v757
    %v759 = vpop.f32.mrb[0].mxu0
    %760 = vmatprep.mubr.bf16.mxu0 %v605
    %761 = vmatmul.mubr.bf16.gmra.mrb[0].mxu0 %v604
    %v762 = vpop.f32.mrb[0].mxu0
    %v763 = vadd.f32 0.0, %v762
    %v764 = vpop.f32.mrb[0].mxu0
    %v765 = vpop.f32.mrb[0].mxu0
    %v766 = vadd.f32 0.0, %v765
    %v767 = vpop.f32.mrb[0].mxu0
    %768 = vmatprep.mubr.bf16.mxu0 %v607
    %769 = vmatmul.mubr.bf16.gmra.mrb[0].mxu0 %v606
    %v770 = vpop.f32.mrb[0].mxu0
    %v771 = vadd.f32 0.0, %v770
    %v772 = vpop.f32.mrb[0].mxu0
    %v773 = vpop.f32.mrb[0].mxu0
    %v774 = vadd.f32 0.0, %v773
    %v775 = vpop.f32.mrb[0].mxu0
    %776 = vmatprep.mubr.bf16.mxu0 %v609
    %777 = vmatmul.mubr.bf16.gmra.mrb[0].mxu0 %v608
    %v778 = vpop.f32.mrb[0].mxu0
    %v779 = vadd.f32 0.0, %v778
    %v780 = vpop.f32.mrb[0].mxu0
    %v781 = vpop.f32.mrb[0].mxu0
    %v782 = vadd.f32 0.0, %v781
    %v783 = vpop.f32.mrb[0].mxu0
    %784 = vmatprep.mubr.bf16.mxu0 %v611
    %785 = vmatmul.mubr.bf16.gmra.mrb[0].mxu0 %v610
    %v786 = vpop.f32.mrb[0].mxu0
    %v787 = vadd.f32 0.0, %v786
    %v788 = vpop.f32.mrb[0].mxu0
    %v789 = vpop.f32.mrb[0].mxu0
    %v790 = vadd.f32 0.0, %v789
    %v791 = vpop.f32.mrb[0].mxu0
    %792 = vmatprep.mubr.bf16.mxu0 %v613
    %793 = vmatmul.mubr.bf16.gmra.mrb[0].mxu0 %v612
    %v794 = vpop.f32.mrb[0].mxu0
    %v795 = vadd.f32 0.0, %v794
    %v796 = vpop.f32.mrb[0].mxu0
    %v797 = vpop.f32.mrb[0].mxu0
    %v798 = vadd.f32 0.0, %v797
    %v799 = vpop.f32.mrb[0].mxu0
    %800 = vmatprep.mubr.bf16.mxu0 %v615
    %801 = vmatmul.mubr.bf16.gmra.mrb[0].mxu0 %v614
    %v802 = vpop.f32.mrb[0].mxu0
    %v803 = vadd.f32 0.0, %v802
    %v804 = vpop.f32.mrb[0].mxu0
    %v805 = vpop.f32.mrb[0].mxu0
    %v806 = vadd.f32 0.0, %v805
    %v807 = vpop.f32.mrb[0].mxu0
    %808 = vdwg.mxu0
    %v809 = vmax.f32 %v683, 0.0
    %v810 = vmax.f32 %v686, 0.0
    %v811 = vmax.f32 %v691, 0.0
    %v812 = vmax.f32 %v694, 0.0
    %v813 = vmax.f32 %v699, 0.0
    %v814 = vmax.f32 %v702, 0.0
    %v815 = vmax.f32 %v707, 0.0
    %v816 = vmax.f32 %v710, 0.0
    %v817 = vmax.f32 %v715, 0.0
    %v818 = vmax.f32 %v718, 0.0
    %v819 = vmax.f32 %v723, 0.0
    %v820 = vmax.f32 %v726, 0.0
    %v821 = vmax.f32 %v731, 0.0
    %v822 = vmax.f32 %v734, 0.0
    %v823 = vmax.f32 %v739, 0.0
    %v824 = vmax.f32 %v742, 0.0
    %v825 = vmax.f32 %v747, 0.0
    %v826 = vmax.f32 %v750, 0.0
    %v827 = vmax.f32 %v755, 0.0
    %v828 = vmax.f32 %v758, 0.0
    %v829 = vmax.f32 %v763, 0.0
    %v830 = vmax.f32 %v766, 0.0
    %v831 = vmax.f32 %v771, 0.0
    %v832 = vmax.f32 %v774, 0.0
    %v833 = vmax.f32 %v779, 0.0
    %v834 = vmax.f32 %v782, 0.0
    %v835 = vmax.f32 %v787, 0.0
    %v836 = vmax.f32 %v790, 0.0
    %v837 = vmax.f32 %v795, 0.0
    %v838 = vmax.f32 %v798, 0.0
    %v839 = vmax.f32 %v803, 0.0
    %v840 = vmax.f32 %v806, 0.0
    %v841 = vpack.c.bf16 %v810, %v809
    %v842 = vpack.c.bf16 %v812, %v811
    %v843 = vpack.c.bf16 %v814, %v813
    %v844 = vpack.c.bf16 %v816, %v815
    %v845 = vpack.c.bf16 %v818, %v817
    %v846 = vpack.c.bf16 %v820, %v819
    %v847 = vpack.c.bf16 %v822, %v821
    %v848 = vpack.c.bf16 %v824, %v823
    %v849 = vpack.c.bf16 %v826, %v825
    %v850 = vpack.c.bf16 %v828, %v827
    %v851 = vpack.c.bf16 %v830, %v829
    %v852 = vpack.c.bf16 %v832, %v831
    %v853 = vpack.c.bf16 %v834, %v833
    %v854 = vpack.c.bf16 %v836, %v835
    %v855 = vpack.c.bf16 %v838, %v837
    %v856 = vpack.c.bf16 %v840, %v839
    %v857 = vld [vmem:[#allocation8] sm:$0xf]
    %v858 = vld [vmem:[#allocation8 + $0x4] sm:$0xf]
    %v859 = vld [vmem:[#allocation8 + $0x8] sm:$0xf]
    %v860 = vld [vmem:[#allocation8 + $0xc] sm:$0xf]
    %v861 = vld [vmem:[#allocation8 + $0x10] sm:$0xf]
    %v862 = vld [vmem:[#allocation8 + $0x14] sm:$0xf]
    %v863 = vld [vmem:[#allocation8 + $0x18] sm:$0xf]
    %v864 = vld [vmem:[#allocation8 + $0x1c] sm:$0xf]
    %v865 = vld [vmem:[#allocation8 + $0x20] sm:$0xf]
    %v866 = vld [vmem:[#allocation8 + $0x24] sm:$0xf]
    %v867 = vld [vmem:[#allocation8 + $0x28] sm:$0xf]
    %v868 = vld [vmem:[#allocation8 + $0x2c] sm:$0xf]
    %v869 = vld [vmem:[#allocation8 + $0x30] sm:$0xf]
    %v870 = vld [vmem:[#allocation8 + $0x34] sm:$0xf]
    %v871 = vld [vmem:[#allocation8 + $0x38] sm:$0xf]
    %v872 = vld [vmem:[#allocation8 + $0x3c] sm:$0xf]
    %v873 = vld [vmem:[%s5] sm:$0x1]
    %v875 = vlaneseq
    %v876 = vshrl.u32 %v875, 7
    %v877 = vsub.s32 0, %v876
    %v878 = vrot.slane %v873, %v877
    %v896 = vunpack.c.l.b16 %v857
    %v897 = vunpack.c.l.b16 %v858
    %v898 = vunpack.c.l.b16 %v859
    %v899 = vunpack.c.l.b16 %v860
    %v900 = vunpack.c.l.b16 %v861
    %v901 = vunpack.c.l.b16 %v862
    %v902 = vunpack.c.l.b16 %v863
    %v903 = vunpack.c.l.b16 %v864
    %v904 = vunpack.c.l.b16 %v865
    %v905 = vunpack.c.l.b16 %v866
    %v906 = vunpack.c.l.b16 %v867
    %v907 = vunpack.c.l.b16 %v868
    %v908 = vunpack.c.l.b16 %v869
    %v909 = vunpack.c.l.b16 %v870
    %v910 = vunpack.c.l.b16 %v871
    %v911 = vunpack.c.l.b16 %v872
    %v912 = vpack.c.b16 %v897, %v896
    %v913 = vpack.c.b16 %v899, %v898
    %v914 = vpack.c.b16 %v901, %v900
    %v915 = vpack.c.b16 %v903, %v902
    %v916 = vpack.c.b16 %v905, %v904
    %v917 = vpack.c.b16 %v907, %v906
    %v918 = vpack.c.b16 %v909, %v908
    %v919 = vpack.c.b16 %v911, %v910
    %928 = vmatprep.subr.bf16.mxu0 0
    %929 = vmatpush1.bf16.msra.mxu0 %v912
    %930 = vmatprep.subr.bf16.mxu0 0
    %931 = vmatpush1.bf16.msra.mxu0 %v913
    %932 = vmatprep.subr.bf16.mxu0 0
    %933 = vmatpush1.bf16.msra.mxu0 %v914
    %934 = vmatprep.subr.bf16.mxu0 0
    %935 = vmatpush1.bf16.msra.mxu0 %v915
    %936 = vmatprep.subr.bf16.mxu0 0
    %937 = vmatpush1.bf16.msra.mxu0 %v916
    %938 = vmatprep.subr.bf16.mxu0 0
    %939 = vmatpush1.bf16.msra.mxu0 %v917
    %940 = vmatprep.subr.bf16.mxu0 0
    %941 = vmatpush1.bf16.msra.mxu0 %v918
    %942 = vmatprep.subr.bf16.mxu0 0
    %943 = vmatpush1.bf16.msra.mxu0 %v919
    %944 = vmatprep.subr.bf16.mxu0 0
    %945 = vmatpush1.bf16.msra.mxu0 0
    %946 = vmatprep.subr.bf16.mxu0 0
    %947 = vmatpush1.bf16.msra.mxu0 0
    %948 = vmatprep.subr.bf16.mxu0 0
    %949 = vmatpush1.bf16.msra.mxu0 0
    %950 = vmatprep.subr.bf16.mxu0 0
    %951 = vmatpush1.bf16.msra.mxu0 0
    %952 = vmatprep.subr.bf16.mxu0 0
    %953 = vmatpush1.bf16.msra.mxu0 0
    %954 = vmatprep.subr.bf16.mxu0 0
    %955 = vmatpush1.bf16.msra.mxu0 0
    %956 = vmatprep.subr.bf16.mxu0 0
    %957 = vmatpush1.bf16.msra.mxu0 0
    %958 = vmatprep.subr.bf16.mxu0 0
    %959 = vmatpush1.bf16.msra.mxu0 0
    %960 = vmatprep.mubr.bf16.mxu0 0
    %961 = vmatmul.mubr.bf16.gmra.mrb[0].mxu0 %v841
    %v962 = vpop.f32.mrb[0].mxu0
    %v963 = vadd.f32 %v878, %v962
    %v964 = vpop.f32.mrb[0].mxu0
    %v965 = vpop.f32.mrb[0].mxu0
    %v966 = vadd.f32 %v878, %v965
    %v967 = vpop.f32.mrb[0].mxu0
    %968 = vmatprep.mubr.bf16.mxu0 0
    %969 = vmatmul.mubr.bf16.gmra.mrb[0].mxu0 %v842
    %v970 = vpop.f32.mrb[0].mxu0
    %v971 = vadd.f32 %v878, %v970
    %v972 = vpop.f32.mrb[0].mxu0
    %v973 = vpop.f32.mrb[0].mxu0
    %v974 = vadd.f32 %v878, %v973
    %v975 = vpop.f32.mrb[0].mxu0
    %976 = vmatprep.mubr.bf16.mxu0 0
    %977 = vmatmul.mubr.bf16.gmra.mrb[0].mxu0 %v843
    %v978 = vpop.f32.mrb[0].mxu0
    %v979 = vadd.f32 %v878, %v978
    %v980 = vpop.f32.mrb[0].mxu0
    %v981 = vpop.f32.mrb[0].mxu0
    %v982 = vadd.f32 %v878, %v981
    %v983 = vpop.f32.mrb[0].mxu0
    %984 = vmatprep.mubr.bf16.mxu0 0
    %985 = vmatmul.mubr.bf16.gmra.mrb[0].mxu0 %v844
    %v986 = vpop.f32.mrb[0].mxu0
    %v987 = vadd.f32 %v878, %v986
    %v988 = vpop.f32.mrb[0].mxu0
    %v989 = vpop.f32.mrb[0].mxu0
    %v990 = vadd.f32 %v878, %v989
    %v991 = vpop.f32.mrb[0].mxu0
    %992 = vmatprep.mubr.bf16.mxu0 0
    %993 = vmatmul.mubr.bf16.gmra.mrb[0].mxu0 %v845
    %v994 = vpop.f32.mrb[0].mxu0
    %v995 = vadd.f32 %v878, %v994
    %v996 = vpop.f32.mrb[0].mxu0
    %v997 = vpop.f32.mrb[0].mxu0
    %v998 = vadd.f32 %v878, %v997
    %v999 = vpop.f32.mrb[0].mxu0
    %1000 = vmatprep.mubr.bf16.mxu0 0
    %1001 = vmatmul.mubr.bf16.gmra.mrb[0].mxu0 %v846
    %v1002 = vpop.f32.mrb[0].mxu0
    %v1003 = vadd.f32 %v878, %v1002
    %v1004 = vpop.f32.mrb[0].mxu0
    %v1005 = vpop.f32.mrb[0].mxu0
    %v1006 = vadd.f32 %v878, %v1005
    %v1007 = vpop.f32.mrb[0].mxu0
    %1008 = vmatprep.mubr.bf16.mxu0 0
    %1009 = vmatmul.mubr.bf16.gmra.mrb[0].mxu0 %v847
    %v1010 = vpop.f32.mrb[0].mxu0
    %v1011 = vadd.f32 %v878, %v1010
    %v1012 = vpop.f32.mrb[0].mxu0
    %v1013 = vpop.f32.mrb[0].mxu0
    %v1014 = vadd.f32 %v878, %v1013
    %v1015 = vpop.f32.mrb[0].mxu0
    %1016 = vmatprep.mubr.bf16.mxu0 0
    %1017 = vmatmul.mubr.bf16.gmra.mrb[0].mxu0 %v848
    %v1018 = vpop.f32.mrb[0].mxu0
    %v1019 = vadd.f32 %v878, %v1018
    %v1020 = vpop.f32.mrb[0].mxu0
    %v1021 = vpop.f32.mrb[0].mxu0
    %v1022 = vadd.f32 %v878, %v1021
    %v1023 = vpop.f32.mrb[0].mxu0
    %1024 = vmatprep.mubr.bf16.mxu0 0
    %1025 = vmatmul.mubr.bf16.gmra.mrb[0].mxu0 %v849
    %v1026 = vpop.f32.mrb[0].mxu0
    %v1027 = vadd.f32 %v878, %v1026
    %v1028 = vpop.f32.mrb[0].mxu0
    %v1029 = vpop.f32.mrb[0].mxu0
    %v1030 = vadd.f32 %v878, %v1029
    %v1031 = vpop.f32.mrb[0].mxu0
    %1032 = vmatprep.mubr.bf16.mxu0 0
    %1033 = vmatmul.mubr.bf16.gmra.mrb[0].mxu0 %v850
    %v1034 = vpop.f32.mrb[0].mxu0
    %v1035 = vadd.f32 %v878, %v1034
    %v1036 = vpop.f32.mrb[0].mxu0
    %v1037 = vpop.f32.mrb[0].mxu0
    %v1038 = vadd.f32 %v878, %v1037
    %v1039 = vpop.f32.mrb[0].mxu0
    %1040 = vmatprep.mubr.bf16.mxu0 0
    %1041 = vmatmul.mubr.bf16.gmra.mrb[0].mxu0 %v851
    %v1042 = vpop.f32.mrb[0].mxu0
    %v1043 = vadd.f32 %v878, %v1042
    %v1044 = vpop.f32.mrb[0].mxu0
    %v1045 = vpop.f32.mrb[0].mxu0
    %v1046 = vadd.f32 %v878, %v1045
    %v1047 = vpop.f32.mrb[0].mxu0
    %1048 = vmatprep.mubr.bf16.mxu0 0
    %1049 = vmatmul.mubr.bf16.gmra.mrb[0].mxu0 %v852
    %v1050 = vpop.f32.mrb[0].mxu0
    %v1051 = vadd.f32 %v878, %v1050
    %v1052 = vpop.f32.mrb[0].mxu0
    %v1053 = vpop.f32.mrb[0].mxu0
    %v1054 = vadd.f32 %v878, %v1053
    %v1055 = vpop.f32.mrb[0].mxu0
    %1056 = vmatprep.mubr.bf16.mxu0 0
    %1057 = vmatmul.mubr.bf16.gmra.mrb[0].mxu0 %v853
    %v1058 = vpop.f32.mrb[0].mxu0
    %v1059 = vadd.f32 %v878, %v1058
    %v1060 = vpop.f32.mrb[0].mxu0
    %v1061 = vpop.f32.mrb[0].mxu0
    %v1062 = vadd.f32 %v878, %v1061
    %v1063 = vpop.f32.mrb[0].mxu0
    %1064 = vmatprep.mubr.bf16.mxu0 0
    %1065 = vmatmul.mubr.bf16.gmra.mrb[0].mxu0 %v854
    %v1066 = vpop.f32.mrb[0].mxu0
    %v1067 = vadd.f32 %v878, %v1066
    %v1068 = vpop.f32.mrb[0].mxu0
    %v1069 = vpop.f32.mrb[0].mxu0
    %v1070 = vadd.f32 %v878, %v1069
    %v1071 = vpop.f32.mrb[0].mxu0
    %1072 = vmatprep.mubr.bf16.mxu0 0
    %1073 = vmatmul.mubr.bf16.gmra.mrb[0].mxu0 %v855
    %v1074 = vpop.f32.mrb[0].mxu0
    %v1075 = vadd.f32 %v878, %v1074
    %v1076 = vpop.f32.mrb[0].mxu0
    %v1077 = vpop.f32.mrb[0].mxu0
    %v1078 = vadd.f32 %v878, %v1077
    %v1079 = vpop.f32.mrb[0].mxu0
    %1080 = vmatprep.mubr.bf16.mxu0 0
    %1081 = vmatmul.mubr.bf16.gmra.mrb[0].mxu0 %v856
    %v1082 = vpop.f32.mrb[0].mxu0
    %v1083 = vadd.f32 %v878, %v1082
    %v1084 = vpop.f32.mrb[0].mxu0
    %v1085 = vpop.f32.mrb[0].mxu0
    %v1086 = vadd.f32 %v878, %v1085
    %v1087 = vpop.f32.mrb[0].mxu0
    %1088 = vdwg.mxu0
    %v1089 = vpack.c.bf16 %v966, %v963
    %v1090 = vpack.c.bf16 %v974, %v971
    %v1091 = vpack.c.bf16 %v982, %v979
    %v1092 = vpack.c.bf16 %v990, %v987
    %v1093 = vpack.c.bf16 %v998, %v995
    %v1094 = vpack.c.bf16 %v1006, %v1003
    %v1095 = vpack.c.bf16 %v1014, %v1011
    %v1096 = vpack.c.bf16 %v1022, %v1019
    %v1097 = vpack.c.bf16 %v1030, %v1027
    %v1098 = vpack.c.bf16 %v1038, %v1035
    %v1099 = vpack.c.bf16 %v1046, %v1043
    %v1100 = vpack.c.bf16 %v1054, %v1051
    %v1101 = vpack.c.bf16 %v1062, %v1059
    %v1102 = vpack.c.bf16 %v1070, %v1067
    %v1103 = vpack.c.bf16 %v1078, %v1075
    %v1104 = vpack.c.bf16 %v1086, %v1083
    %1105 = vmatprep.subr.bf16.mxu0 0
    %1106 = vmatpush1.bf16.msra.mxu0 %v1089
    %1107 = vmatprep.subr.bf16.mxu0 0
    %1108 = vmatpush1.bf16.msra.mxu0 %v1090
    %1109 = vmatprep.subr.bf16.mxu0 0
    %1110 = vmatpush1.bf16.msra.mxu0 %v1091
    %1111 = vmatprep.subr.bf16.mxu0 0
    %1112 = vmatpush1.bf16.msra.mxu0 %v1092
    %1113 = vmatprep.subr.bf16.mxu0 0
    %1114 = vmatpush1.bf16.msra.mxu0 %v1093
    %1115 = vmatprep.subr.bf16.mxu0 0
    %1116 = vmatpush1.bf16.msra.mxu0 %v1094
    %1117 = vmatprep.subr.bf16.mxu0 0
    %1118 = vmatpush1.bf16.msra.mxu0 %v1095
    %1119 = vmatprep.subr.bf16.mxu0 0
    %1120 = vmatpush1.bf16.msra.mxu0 %v1096
    %1121 = vmatprep.subr.bf16.mxu0 0
    %1122 = vmatpush1.bf16.msra.mxu0 %v1097
    %1123 = vmatprep.subr.bf16.mxu0 0
    %1124 = vmatpush1.bf16.msra.mxu0 %v1098
    %1125 = vmatprep.subr.bf16.mxu0 0
    %1126 = vmatpush1.bf16.msra.mxu0 %v1099
    %1127 = vmatprep.subr.bf16.mxu0 0
    %1128 = vmatpush1.bf16.msra.mxu0 %v1100
    %1129 = vmatprep.subr.bf16.mxu0 0
    %1130 = vmatpush1.bf16.msra.mxu0 %v1101
    %1131 = vmatprep.subr.bf16.mxu0 0
    %1132 = vmatpush1.bf16.msra.mxu0 %v1102
    %1133 = vmatprep.subr.bf16.mxu0 0
    %1134 = vmatpush1.bf16.msra.mxu0 %v1103
    %1135 = vmatprep.subr.bf16.mxu0 0
    %1136 = vmatpush1.bf16.msra.mxu0 %v1104
    %1137 = vmatprep.mubr.bf16.mxu0 %v585
    %1138 = vmatmul.mubr.bf16.gmra.mrb[0].mxu0 %v584
    %v1139 = vpop.f32.mrb[0].mxu0
    %v1140 = vadd.f32 0.0, %v1139
    %v1141 = vpop.f32.mrb[0].mxu0
    %v1142 = vpop.f32.mrb[0].mxu0
    %v1143 = vadd.f32 0.0, %v1142
    %v1144 = vpop.f32.mrb[0].mxu0
    %1145 = vmatprep.mubr.bf16.mxu0 %v587
    %1146 = vmatmul.mubr.bf16.gmra.mrb[0].mxu0 %v586
    %v1147 = vpop.f32.mrb[0].mxu0
    %v1148 = vadd.f32 0.0, %v1147
    %v1149 = vpop.f32.mrb[0].mxu0
    %v1150 = vpop.f32.mrb[0].mxu0
    %v1151 = vadd.f32 0.0, %v1150
    %v1152 = vpop.f32.mrb[0].mxu0
    %1153 = vmatprep.mubr.bf16.mxu0 %v589
    %1154 = vmatmul.mubr.bf16.gmra.mrb[0].mxu0 %v588
    %v1155 = vpop.f32.mrb[0].mxu0
    %v1156 = vadd.f32 0.0, %v1155
    %v1157 = vpop.f32.mrb[0].mxu0
    %v1158 = vpop.f32.mrb[0].mxu0
    %v1159 = vadd.f32 0.0, %v1158
    %v1160 = vpop.f32.mrb[0].mxu0
    %1161 = vmatprep.mubr.bf16.mxu0 %v591
    %1162 = vmatmul.mubr.bf16.gmra.mrb[0].mxu0 %v590
    %v1163 = vpop.f32.mrb[0].mxu0
    %v1164 = vadd.f32 0.0, %v1163
    %v1165 = vpop.f32.mrb[0].mxu0
    %v1166 = vpop.f32.mrb[0].mxu0
    %v1167 = vadd.f32 0.0, %v1166
    %v1168 = vpop.f32.mrb[0].mxu0
    %1169 = vmatprep.mubr.bf16.mxu0 %v593
    %1170 = vmatmul.mubr.bf16.gmra.mrb[0].mxu0 %v592
    %v1171 = vpop.f32.mrb[0].mxu0
    %v1172 = vadd.f32 0.0, %v1171
    %v1173 = vpop.f32.mrb[0].mxu0
    %v1174 = vpop.f32.mrb[0].mxu0
    %v1175 = vadd.f32 0.0, %v1174
    %v1176 = vpop.f32.mrb[0].mxu0
    %1177 = vmatprep.mubr.bf16.mxu0 %v595
    %1178 = vmatmul.mubr.bf16.gmra.mrb[0].mxu0 %v594
    %v1179 = vpop.f32.mrb[0].mxu0
    %v1180 = vadd.f32 0.0, %v1179
    %v1181 = vpop.f32.mrb[0].mxu0
    %v1182 = vpop.f32.mrb[0].mxu0
    %v1183 = vadd.f32 0.0, %v1182
    %v1184 = vpop.f32.mrb[0].mxu0
    %1185 = vmatprep.mubr.bf16.mxu0 %v597
    %1186 = vmatmul.mubr.bf16.gmra.mrb[0].mxu0 %v596
    %v1187 = vpop.f32.mrb[0].mxu0
    %v1188 = vadd.f32 0.0, %v1187
    %v1189 = vpop.f32.mrb[0].mxu0
    %v1190 = vpop.f32.mrb[0].mxu0
    %v1191 = vadd.f32 0.0, %v1190
    %v1192 = vpop.f32.mrb[0].mxu0
    %1193 = vmatprep.mubr.bf16.mxu0 %v599
    %1194 = vmatmul.mubr.bf16.gmra.mrb[0].mxu0 %v598
    %v1195 = vpop.f32.mrb[0].mxu0
    %v1196 = vadd.f32 0.0, %v1195
    %v1197 = vpop.f32.mrb[0].mxu0
    %v1198 = vpop.f32.mrb[0].mxu0
    %v1199 = vadd.f32 0.0, %v1198
    %v1200 = vpop.f32.mrb[0].mxu0
    %1201 = vmatprep.mubr.bf16.mxu0 %v601
    %1202 = vmatmul.mubr.bf16.gmra.mrb[0].mxu0 %v600
    %v1203 = vpop.f32.mrb[0].mxu0
    %v1204 = vadd.f32 0.0, %v1203
    %v1205 = vpop.f32.mrb[0].mxu0
    %v1206 = vpop.f32.mrb[0].mxu0
    %v1207 = vadd.f32 0.0, %v1206
    %v1208 = vpop.f32.mrb[0].mxu0
    %1209 = vmatprep.mubr.bf16.mxu0 %v603
    %1210 = vmatmul.mubr.bf16.gmra.mrb[0].mxu0 %v602
    %v1211 = vpop.f32.mrb[0].mxu0
    %v1212 = vadd.f32 0.0, %v1211
    %v1213 = vpop.f32.mrb[0].mxu0
    %v1214 = vpop.f32.mrb[0].mxu0
    %v1215 = vadd.f32 0.0, %v1214
    %v1216 = vpop.f32.mrb[0].mxu0
    %1217 = vmatprep.mubr.bf16.mxu0 %v605
    %1218 = vmatmul.mubr.bf16.gmra.mrb[0].mxu0 %v604
    %v1219 = vpop.f32.mrb[0].mxu0
    %v1220 = vadd.f32 0.0, %v1219
    %v1221 = vpop.f32.mrb[0].mxu0
    %v1222 = vpop.f32.mrb[0].mxu0
    %v1223 = vadd.f32 0.0, %v1222
    %v1224 = vpop.f32.mrb[0].mxu0
    %1225 = vmatprep.mubr.bf16.mxu0 %v607
    %1226 = vmatmul.mubr.bf16.gmra.mrb[0].mxu0 %v606
    %v1227 = vpop.f32.mrb[0].mxu0
    %v1228 = vadd.f32 0.0, %v1227
    %v1229 = vpop.f32.mrb[0].mxu0
    %v1230 = vpop.f32.mrb[0].mxu0
    %v1231 = vadd.f32 0.0, %v1230
    %v1232 = vpop.f32.mrb[0].mxu0
    %1233 = vmatprep.mubr.bf16.mxu0 %v609
    %1234 = vmatmul.mubr.bf16.gmra.mrb[0].mxu0 %v608
    %v1235 = vpop.f32.mrb[0].mxu0
    %v1236 = vadd.f32 0.0, %v1235
    %v1237 = vpop.f32.mrb[0].mxu0
    %v1238 = vpop.f32.mrb[0].mxu0
    %v1239 = vadd.f32 0.0, %v1238
    %v1240 = vpop.f32.mrb[0].mxu0
    %1241 = vmatprep.mubr.bf16.mxu0 %v611
    %1242 = vmatmul.mubr.bf16.gmra.mrb[0].mxu0 %v610
    %v1243 = vpop.f32.mrb[0].mxu0
    %v1244 = vadd.f32 0.0, %v1243
    %v1245 = vpop.f32.mrb[0].mxu0
    %v1246 = vpop.f32.mrb[0].mxu0
    %v1247 = vadd.f32 0.0, %v1246
    %v1248 = vpop.f32.mrb[0].mxu0
    %1249 = vmatprep.mubr.bf16.mxu0 %v613
    %1250 = vmatmul.mubr.bf16.gmra.mrb[0].mxu0 %v612
    %v1251 = vpop.f32.mrb[0].mxu0
    %v1252 = vadd.f32 0.0, %v1251
    %v1253 = vpop.f32.mrb[0].mxu0
    %v1254 = vpop.f32.mrb[0].mxu0
    %v1255 = vadd.f32 0.0, %v1254
    %v1256 = vpop.f32.mrb[0].mxu0
    %1257 = vmatprep.mubr.bf16.mxu0 %v615
    %1258 = vmatmul.mubr.bf16.gmra.mrb[0].mxu0 %v614
    %v1259 = vpop.f32.mrb[0].mxu0
    %v1260 = vadd.f32 0.0, %v1259
    %v1261 = vpop.f32.mrb[0].mxu0
    %v1262 = vpop.f32.mrb[0].mxu0
    %v1263 = vadd.f32 0.0, %v1262
    %v1264 = vpop.f32.mrb[0].mxu0
    %1265 = vdwg.mxu0
    %1266 = vst [vmem:[#allocation10] sm:$0xff] %v1140
    %1267 = vst [vmem:[#allocation10 + $0x8] sm:$0xff] %v1143
    %1268 = vst [vmem:[#allocation10 + $0x10] sm:$0xff] %v1148
    %1269 = vst [vmem:[#allocation10 + $0x18] sm:$0xff] %v1151
    %1270 = vst [vmem:[#allocation10 + $0x20] sm:$0xff] %v1156
    %1271 = vst [vmem:[#allocation10 + $0x28] sm:$0xff] %v1159
    %1272 = vst [vmem:[#allocation10 + $0x30] sm:$0xff] %v1164
    %1273 = vst [vmem:[#allocation10 + $0x38] sm:$0xff] %v1167
    %1274 = vst [vmem:[#allocation10 + $0x40] sm:$0xff] %v1172
    %1275 = vst [vmem:[#allocation10 + $0x48] sm:$0xff] %v1175
    %1276 = vst [vmem:[#allocation10 + $0x50] sm:$0xff] %v1180
    %1277 = vst [vmem:[#allocation10 + $0x58] sm:$0xff] %v1183
    %1278 = vst [vmem:[#allocation10 + $0x60] sm:$0xff] %v1188
    %1279 = vst [vmem:[#allocation10 + $0x68] sm:$0xff] %v1191
    %1280 = vst [vmem:[#allocation10 + $0x70] sm:$0xff] %v1196
    %1281 = vst [vmem:[#allocation10 + $0x78] sm:$0xff] %v1199
    %1282 = vst [vmem:[#allocation10 + $0x80] sm:$0xff] %v1204
    %1283 = vst [vmem:[#allocation10 + $0x88] sm:$0xff] %v1207
    %1284 = vst [vmem:[#allocation10 + $0x90] sm:$0xff] %v1212
    %1285 = vst [vmem:[#allocation10 + $0x98] sm:$0xff] %v1215
    %1286 = vst [vmem:[#allocation10 + $0xa0] sm:$0xff] %v1220
    %1287 = vst [vmem:[#allocation10 + $0xa8] sm:$0xff] %v1223
    %1288 = vst [vmem:[#allocation10 + $0xb0] sm:$0xff] %v1228
    %1289 = vst [vmem:[#allocation10 + $0xb8] sm:$0xff] %v1231
    %1290 = vst [vmem:[#allocation10 + $0xc0] sm:$0xff] %v1236
    %1291 = vst [vmem:[#allocation10 + $0xc8] sm:$0xff] %v1239
    %1292 = vst [vmem:[#allocation10 + $0xd0] sm:$0xff] %v1244
    %1293 = vst [vmem:[#allocation10 + $0xd8] sm:$0xff] %v1247
    %1294 = vst [vmem:[#allocation10 + $0xe0] sm:$0xff] %v1252
    %1295 = vst [vmem:[#allocation10 + $0xe8] sm:$0xff] %v1255
    %1296 = vst [vmem:[#allocation10 + $0xf0] sm:$0xff] %v1260
    %1297 = vst [vmem:[#allocation10 + $0xf8] sm:$0xff] %v1263
    // Predicated region
    $region42: #{tpu_custom_call.1} parent=1 // pred_check
      _
    $region43: #{tpu_custom_call.1} parent=1 // pred_check_branch
      %1299 = sbr.rel (0) target = $region45
    $region44: #{tpu_custom_call.1} parent=1 // pred_region
      %s1301 = ssub.s32 4096, 4096
      %1302 = vsyncadd [#allocation4], %s1301
      %s1303 = sshll.u32 [#allocation10], 4
      %s1304 = int_to_ptr.vmem [resolvable:$true] %s1303
      %1309 = dma.vmem_to_hbm [thread:$0]  %s1304, 4096, %s6, [#allocation4], 128, 128, 8
    $region45: #{tpu_custom_call.1} parent=1 // pred_fallthru
      _
    // Predicated region
    $region46: #{tpu_custom_call.1} parent=1 // pred_check
      _
    $region47: #{tpu_custom_call.1} parent=1 // pred_check_branch
      %1311 = sbr.rel (0) target = $region49
    $region48: #{tpu_custom_call.1} parent=1 // pred_region
      %1312 = dma.done [#allocation4], 4096
    $region49: #{tpu_custom_call.1} parent=1 // pred_fallthru
      _
    %1313 = vsyncpa [#allocation3], 1
    %1314 = vsyncpa [#allocation6], 1
    %1315 = vsyncpa [#allocation9], 1
    %1316 = vsyncpa [#allocation4], 1

</llo_original>
